<compile_context>
chip_gen: v5e
topology: v5e:2x2
jax: 0.10.0
libtpu: 0.0.40
codegen_flags: <defaults>
</compile_context>

<pallas_src>
import functools

import jax
import jax.numpy as jnp
from jax import lax
from jax.experimental import pallas as pl
from jax.experimental.pallas import tpu as pltpu


def _round_up(x, m):
    return (x + m - 1) // m * m


def rnn_kernel(emb_ref, wih_ref, whh_ref, b_ref, wfc_ref, bfc_ref,
               out_ref, pre_scr, h_scr):
    """One (batch-tile, time-tile) grid step.

    emb_ref : [1, Tt*Bt, Dp] bf16  time-major embedded tokens for this tile
    wih_ref : [Dp, Hp]       bf16  input->hidden weight (pre-transposed, padded)
    whh_ref : [Hp, Hp]       bf16  hidden->hidden weight (pre-transposed, padded)
    b_ref   : [1,  Hp]       f32   combined bias b_ih + b_hh (padded)
    wfc_ref : [Hp, Op]       bf16  fc weight (pre-transposed, padded)
    bfc_ref : [1,  Op]       f32   fc bias (padded)
    out_ref : [Bt, Op]       f32   logits for this batch tile
    pre_scr : [Tt*Bt, Hp]    bf16  scratch: hoisted input projection
    h_scr   : [Bt, Hp]       f32   scratch: hidden state (persists across ti)
    """
    ti = pl.program_id(1)
    bt = h_scr.shape[0]
    hp = h_scr.shape[1]
    tt = pre_scr.shape[0] // bt

    # nn.RNN default h0 = 0; re-init at the start of every batch tile's sweep.
    @pl.when(ti == 0)
    def _init():
        h_scr[...] = jnp.zeros_like(h_scr)

    # Hoisted input projection + bias for the whole time block: one big
    # [Tt*Bt, Dp] @ [Dp, Hp] MXU matmul instead of Tt tiny ones inside the loop.
    # Stored bf16 (it is a pre-activation later added into an f32 accumulator).
    pre_scr[...] = (
        jnp.dot(emb_ref[0], wih_ref[...], preferred_element_type=jnp.float32)
        + b_ref[...]).astype(jnp.bfloat16)

    # Hoist the recurrent weight load out of the unrolled loop.
    whh = whh_ref[...]
    split = (hp >= 256) and (hp % 256 == 0)
    hh = hp // 2
    if split:
        whh_lo = whh[:, :hh]
        whh_hi = whh[:, hh:]

    # Serial recurrence: h_t = tanh(pre_t + h_{t-1} @ W_hh^T).  Partially
    # unrolled (cap 8) so the LLO scheduler overlaps MXU / EUP / bookkeeping
    # without blowing up vreg live ranges on long time blocks.
    def step(t, carry):
        row0 = pl.multiple_of(t * bt, 16)
        pre_t = pre_scr[pl.ds(row0, bt), :].astype(jnp.float32)   # [Bt, Hp]
        h_b16 = h_scr[...].astype(jnp.bfloat16)                   # bf16 MXU LHS
        if split:
            # Two column halves: tanh (EUP) on the first half overlaps the MXU
            # producing the second half (different VLIW slots).
            acc_lo = pre_t[:, :hh] + jnp.dot(
                h_b16, whh_lo, preferred_element_type=jnp.float32)
            acc_hi = pre_t[:, hh:] + jnp.dot(
                h_b16, whh_hi, preferred_element_type=jnp.float32)
            h_scr[:, :hh] = jnp.tanh(acc_lo)
            h_scr[:, hh:] = jnp.tanh(acc_hi)
        else:
            acc = pre_t + jnp.dot(h_b16, whh,
                                  preferred_element_type=jnp.float32)
            h_scr[...] = jnp.tanh(acc)                             # f32 EUP tanh
        return carry

    lax.fori_loop(0, tt, step, 0, unroll=min(tt, 8))

    # Final linear on the last hidden state (lane-dense [Bt, Op] store).
    @pl.when(ti == pl.num_programs(1) - 1)
    def _finalize():
        out_ref[...] = (
            jnp.dot(h_scr[...].astype(jnp.bfloat16), wfc_ref[...],
                    preferred_element_type=jnp.float32)
            + bfc_ref[...])


@functools.partial(jax.jit, static_argnames=("t_tile", "b_tile"))
def rnn_forward(token_ids, emb_table, w_ih, w_hh, b_ih, b_hh, w_fc, b_fc,
                *, t_tile=None, b_tile=None):
    """Mirror of RNN.forward: emb lookup -> tanh RNN -> last step -> Linear.

    token_ids : [B, T] int32
    emb_table : [V, D] f32, w_ih: [H, D], w_hh: [H, H], b_ih/b_hh: [H]
    w_fc      : [O, H], b_fc: [O]
    returns   : [B, O] f32 logits
    """
    B, T = token_ids.shape
    D = emb_table.shape[1]
    H = w_ih.shape[0]
    O = w_fc.shape[0]

    # ---- padding to hardware-friendly shapes --------------------------------
    Dp = _round_up(D, 128)    # dense 128-lane contraction dim
    Hp = _round_up(H, 128)    # lane-dense hidden dim
    Op = _round_up(O, 128)    # lane-dense output store

    # Batch: bf16 MXU operands pack two rows per sublane -> multiples of 16.
    B16 = _round_up(B, 16)
    if b_tile is None:
        # Tall LHS for the recurrence matmul: up to 256 rows (v6e/v7x MXU).
        b_tile = min(B16, 256)
    assert b_tile % 16 == 0, "b_tile must be a multiple of 16 (bf16 sublanes)"
    Bp = _round_up(B16, b_tile)
    n_bt = Bp // b_tile

    # Time tile: largest divisor of T whose (bf16 pre_scr + double-buffered
    # bf16 emb block) footprint stays under ~24 MiB (v7x 64-MiB safe).
    if t_tile is None:
        budget = 24 * 1024 * 1024
        per_t = b_tile * (Hp * 2 + 2 * Dp * 2)
        max_t = max(1, budget // per_t)
        t_tile = 1
        for cand in range(min(T, max_t), 0, -1):
            if T % cand == 0:
                t_tile = cand
                break
    assert T % t_tile == 0
    n_tt = T // t_tile

    # ---- glue: embedding gather, emitted directly in the kernel's layout ----
    ids = token_ids.astype(jnp.int32)
    if Bp != B:
        ids = jnp.pad(ids, ((0, Bp - B), (0, 0)))        # padded rows -> token 0
    # Within each batch group the tokens are ordered time-major, so the gather
    # itself produces the contiguous [t*Bt + b, Dp] rows the kernel consumes
    # (no separate transpose pass over the big [B,T,D] slab).
    ids_g = ids.reshape(n_bt, b_tile, T).transpose(0, 2, 1).reshape(n_bt, T * b_tile)
    emb_p = jnp.pad(emb_table, ((0, 0), (0, Dp - D))).astype(jnp.bfloat16)  # [V, Dp]
    emb_g = emb_p[ids_g]                                  # [G, T*Bt, Dp] bf16

    # ---- glue: pre-transpose / zero-pad / cast weights -----------------------
    wih_t = jnp.pad(w_ih.T, ((0, Dp - D), (0, Hp - H))).astype(jnp.bfloat16)  # [Dp, Hp]
    whh_t = jnp.pad(w_hh.T, ((0, Hp - H), (0, Hp - H))).astype(jnp.bfloat16)  # [Hp, Hp]
    b = jnp.pad(b_ih + b_hh, (0, Hp - H)).reshape(1, Hp).astype(jnp.float32)  # [1, Hp]
    wfc_t = jnp.pad(w_fc.T, ((0, Hp - H), (0, Op - O))).astype(jnp.bfloat16)  # [Hp, Op]
    bfc = jnp.pad(b_fc, (0, Op - O)).reshape(1, Op).astype(jnp.float32)       # [1, Op]

    # ---- VMEM footprint / limit ----------------------------------------------
    emb_block = t_tile * b_tile * Dp * 2          # bf16, double-buffered
    weights = (Dp * Hp + Hp * Hp + Hp * Op) * 2 + (Hp + Op) * 4  # single-buffered
    out_block = b_tile * Op * 4
    pre_bytes = t_tile * b_tile * Hp * 2          # bf16 scratch
    h_bytes = b_tile * Hp * 4
    vmem_est = 2 * emb_block + weights + 2 * out_block + pre_bytes + h_bytes
    vmem_limit = int(min(max(int(vmem_est * 1.25) + (4 << 20), 32 << 20), 56 << 20))

    cost = pl.CostEstimate(
        flops=2 * T * Bp * Dp * Hp + 2 * T * Bp * Hp * Hp + 2 * Bp * Hp * Op,
        transcendentals=T * Bp * Hp,
        bytes_accessed=(emb_g.size * 2
                        + (wih_t.size + whh_t.size + wfc_t.size) * 2
                        + (b.size + bfc.size + Bp * Op) * 4),
    )

    const2d = pl.Buffered(1)   # constant operands: no point double-buffering
    grid_spec = pltpu.PrefetchScalarGridSpec(
        num_scalar_prefetch=0,
        grid=(n_bt, n_tt),                                  # (batch tiles, time tiles)
        in_specs=[
            pl.BlockSpec((1, t_tile * b_tile, Dp), lambda bi, ti: (bi, ti, 0)),
            pl.BlockSpec((Dp, Hp), lambda bi, ti: (0, 0), pipeline_mode=const2d),
            pl.BlockSpec((Hp, Hp), lambda bi, ti: (0, 0), pipeline_mode=const2d),
            pl.BlockSpec((1, Hp), lambda bi, ti: (0, 0), pipeline_mode=const2d),
            pl.BlockSpec((Hp, Op), lambda bi, ti: (0, 0), pipeline_mode=const2d),
            pl.BlockSpec((1, Op), lambda bi, ti: (0, 0), pipeline_mode=const2d),
        ],
        out_specs=pl.BlockSpec((b_tile, Op), lambda bi, ti: (bi, 0)),
        scratch_shapes=[
            pltpu.VMEM((t_tile * b_tile, Hp), jnp.bfloat16),  # hoisted projection
            pltpu.VMEM((b_tile, Hp), jnp.float32),            # hidden state
        ],
    )

    out_padded = pl.pallas_call(
        rnn_kernel,
        out_shape=jax.ShapeDtypeStruct((Bp, Op), jnp.float32),
        grid_spec=grid_spec,
        compiler_params=pltpu.CompilerParams(
            dimension_semantics=("parallel", "arbitrary"),
            vmem_limit_bytes=vmem_limit,
        ),
        cost_estimate=cost,
    )(emb_g, wih_t, whh_t, b, wfc_t, bfc)

    return out_padded[:B, :O]


def reference_forward(token_ids, emb_table, w_ih, w_hh, b_ih, b_hh, w_fc, b_fc):
    """Pure-JAX f32 reference of the same forward pass (for sanity checking)."""
    emb = emb_table[token_ids]                      # [B, T, D]
    B, T, _ = emb.shape
    H = w_ih.shape[0]
    h = jnp.zeros((B, H), jnp.float32)
    for t in range(T):
        h = jnp.tanh(emb[:, t, :] @ w_ih.T + b_ih + h @ w_hh.T + b_hh)
    return h @ w_fc.T + b_fc


if __name__ == "__main__":
    # Small shapes consistent with the module's forward:
    # token ids [B, T] -> embedding D -> RNN hidden H -> fc output O
    B, T = 2, 8
    VOCAB, D, H, O = 64, 32, 32, 2

    key = jax.random.PRNGKey(0)
    k_tok, k_emb, k_wih, k_whh, k_bih, k_bhh, k_wfc, k_bfc = jax.random.split(key, 8)

    token_ids = jax.random.randint(k_tok, (B, T), 0, VOCAB, dtype=jnp.int32)
    emb_table = jax.random.normal(k_emb, (VOCAB, D), jnp.float32) * 0.1
    w_ih = jax.random.normal(k_wih, (H, D), jnp.float32) * 0.1
    w_hh = jax.random.normal(k_whh, (H, H), jnp.float32) * 0.1
    b_ih = jax.random.normal(k_bih, (H,), jnp.float32) * 0.1
    b_hh = jax.random.normal(k_bhh, (H,), jnp.float32) * 0.1
    w_fc = jax.random.normal(k_wfc, (O, H), jnp.float32) * 0.1
    b_fc = jax.random.normal(k_bfc, (O,), jnp.float32) * 0.1

    out = rnn_forward(token_ids, emb_table, w_ih, w_hh, b_ih, b_hh, w_fc, b_fc)
    out = jax.block_until_ready(out)

    ref = reference_forward(token_ids, emb_table, w_ih, w_hh, b_ih, b_hh, w_fc, b_fc)
    assert out.shape == (B, O), out.shape
    # bf16 MXU operands / bf16 pre-activation with f32 accumulation ->
    # tolerance loosened vs the f32 reference.
    assert jnp.allclose(out, ref, atol=2e-2, rtol=2e-2), (out, ref)

    print("KERNEL_OK")
</pallas_src>

<mosaic_0001>
module attributes {stable_mosaic.version = 11 : i64} {
  func.func @rnn_kernel(%arg0: i32, %arg1: i32, %arg2: memref<1x128x128xbf16, #tpu.memory_space<vmem>>, %arg3: memref<128x128xbf16, #tpu.memory_space<vmem>>, %arg4: memref<128x128xbf16, #tpu.memory_space<vmem>>, %arg5: memref<1x128xf32, #tpu.memory_space<vmem>>, %arg6: memref<128x128xbf16, #tpu.memory_space<vmem>>, %arg7: memref<1x128xf32, #tpu.memory_space<vmem>>, %arg8: memref<16x128xf32, #tpu.memory_space<vmem>>, %arg9: memref<128x128xbf16, #tpu.memory_space<vmem>>, %arg10: memref<16x128xf32, #tpu.memory_space<vmem>>) attributes {dimension_semantics = [#tpu.dimension_semantics<parallel>, #tpu.dimension_semantics<arbitrary>], iteration_bounds = array<i64: 1, 1>, scalar_prefetch = 0 : i64, scratch_operands = 2 : i64, tpu.core_type = #tpu.core_type<tc>, window_params = [{transform_indices = @transform_0, window_bounds = array<i64: 1, 128, 128>}, {pipeline_mode = #tpu.pipeline_mode<synchronous>, transform_indices = @transform_1, window_bounds = array<i64: 128, 128>}, {pipeline_mode = #tpu.pipeline_mode<synchronous>, transform_indices = @transform_2, window_bounds = array<i64: 128, 128>}, {pipeline_mode = #tpu.pipeline_mode<synchronous>, transform_indices = @transform_3, window_bounds = array<i64: 1, 128>}, {pipeline_mode = #tpu.pipeline_mode<synchronous>, transform_indices = @transform_4, window_bounds = array<i64: 128, 128>}, {pipeline_mode = #tpu.pipeline_mode<synchronous>, transform_indices = @transform_5, window_bounds = array<i64: 1, 128>}, {transform_indices = @transform_6, window_bounds = array<i64: 16, 128>}]} {
    %c0_i32 = arith.constant 0 : i32
    %0 = arith.cmpi eq, %arg1, %c0_i32 : i32
    %1 = arith.extui %0 : i1 to i32
    %c0_i32_0 = arith.constant 0 : i32
    %2 = arith.cmpi ne, %1, %c0_i32_0 : i32
    scf.if %2 {
      %cst_69 = arith.constant 0.000000e+00 : f32
      %104 = vector.broadcast %cst_69 : f32 to vector<16x128xf32>
      %c0_70 = arith.constant 0 : index
      %c0_71 = arith.constant 0 : index
      %105 = vector.load %arg10[%c0_70, %c0_71] : memref<16x128xf32, #tpu.memory_space<vmem>>, vector<16x128xf32>
      tpu.vector_store %arg10[%c0_70, %c0_71], %104 {strides = array<i32>} : memref<16x128xf32, #tpu.memory_space<vmem>>, vector<16x128xf32>,
    } else {
    }
    %c0 = arith.constant 0 : index
    %c0_1 = arith.constant 0 : index
    %c0_2 = arith.constant 0 : index
    %3 = vector.load %arg2[%c0, %c0_1, %c0_2] : memref<1x128x128xbf16, #tpu.memory_space<vmem>>, vector<1x128x128xbf16>
    %4 = vector.shape_cast %3 : vector<1x128x128xbf16> to vector<128x128xbf16>
    %c0_3 = arith.constant 0 : index
    %c0_4 = arith.constant 0 : index
    %5 = vector.load %arg3[%c0_3, %c0_4] : memref<128x128xbf16, #tpu.memory_space<vmem>>, vector<128x128xbf16>
    %cst = arith.constant dense<0.000000e+00> : vector<128x128xf32>
    %6 = tpu.matmul %4, %5, %cst {dimension_numbers = #tpu.dot_dimension_numbers<[1], [0], [0], [1], [0, 0, 1, 1], [], []>} : vector<128x128xbf16>, vector<128x128xbf16>, vector<128x128xf32> -> vector<128x128xf32>
    %c0_5 = arith.constant 0 : index
    %c0_6 = arith.constant 0 : index
    %7 = vector.load %arg5[%c0_5, %c0_6] : memref<1x128xf32, #tpu.memory_space<vmem>>, vector<1x128xf32>
    %8 = vector.broadcast %7 : vector<1x128xf32> to vector<128x128xf32>
    %9 = arith.addf %6, %8 : vector<128x128xf32>
    %10 = arith.truncf %9 : vector<128x128xf32> to vector<128x128xbf16>
    %c0_7 = arith.constant 0 : index
    %c0_8 = arith.constant 0 : index
    %11 = vector.load %arg9[%c0_7, %c0_8] : memref<128x128xbf16, #tpu.memory_space<vmem>>, vector<128x128xbf16>
    tpu.vector_store %arg9[%c0_7, %c0_8], %10 {strides = array<i32>} : memref<128x128xbf16, #tpu.memory_space<vmem>>, vector<128x128xbf16>,
    %c0_9 = arith.constant 0 : index
    %c0_10 = arith.constant 0 : index
    %12 = vector.load %arg4[%c0_9, %c0_10] : memref<128x128xbf16, #tpu.memory_space<vmem>>, vector<128x128xbf16>
    %c0_i32_11 = arith.constant 0 : i32
    %c16_i32 = arith.constant 16 : i32
    %13 = arith.muli %c0_i32_11, %c16_i32 : i32
    %14 = tpu.assume_multiple %13, 16 : i32
    %15 = arith.index_cast %14 : i32 to index
    %c0_12 = arith.constant 0 : index
    %16 = vector.load %arg9[%15, %c0_12] : memref<128x128xbf16, #tpu.memory_space<vmem>>, vector<16x128xbf16>
    %17 = arith.extf %16 : vector<16x128xbf16> to vector<16x128xf32>
    %c0_13 = arith.constant 0 : index
    %c0_14 = arith.constant 0 : index
    %18 = vector.load %arg10[%c0_13, %c0_14] : memref<16x128xf32, #tpu.memory_space<vmem>>, vector<16x128xf32>
    %19 = arith.truncf %18 : vector<16x128xf32> to vector<16x128xbf16>
    %cst_15 = arith.constant dense<0.000000e+00> : vector<16x128xf32>
    %20 = tpu.matmul %19, %12, %cst_15 {dimension_numbers = #tpu.dot_dimension_numbers<[1], [0], [0], [1], [0, 0, 1, 1], [], []>} : vector<16x128xbf16>, vector<128x128xbf16>, vector<16x128xf32> -> vector<16x128xf32>
    %21 = arith.addf %17, %20 : vector<16x128xf32>
    %22 = math.tanh %21 : vector<16x128xf32>
    %c0_16 = arith.constant 0 : index
    %c0_17 = arith.constant 0 : index
    %23 = vector.load %arg10[%c0_16, %c0_17] : memref<16x128xf32, #tpu.memory_space<vmem>>, vector<16x128xf32>
    tpu.vector_store %arg10[%c0_16, %c0_17], %22 {strides = array<i32>} : memref<16x128xf32, #tpu.memory_space<vmem>>, vector<16x128xf32>,
    %c1_i32 = arith.constant 1 : i32
    %c16_i32_18 = arith.constant 16 : i32
    %24 = arith.muli %c1_i32, %c16_i32_18 : i32
    %25 = tpu.assume_multiple %24, 16 : i32
    %26 = arith.index_cast %25 : i32 to index
    %c0_19 = arith.constant 0 : index
    %27 = vector.load %arg9[%26, %c0_19] : memref<128x128xbf16, #tpu.memory_space<vmem>>, vector<16x128xbf16>
    %28 = arith.extf %27 : vector<16x128xbf16> to vector<16x128xf32>
    %c0_20 = arith.constant 0 : index
    %c0_21 = arith.constant 0 : index
    %29 = vector.load %arg10[%c0_20, %c0_21] : memref<16x128xf32, #tpu.memory_space<vmem>>, vector<16x128xf32>
    %30 = arith.truncf %29 : vector<16x128xf32> to vector<16x128xbf16>
    %cst_22 = arith.constant dense<0.000000e+00> : vector<16x128xf32>
    %31 = tpu.matmul %30, %12, %cst_22 {dimension_numbers = #tpu.dot_dimension_numbers<[1], [0], [0], [1], [0, 0, 1, 1], [], []>} : vector<16x128xbf16>, vector<128x128xbf16>, vector<16x128xf32> -> vector<16x128xf32>
    %32 = arith.addf %28, %31 : vector<16x128xf32>
    %33 = math.tanh %32 : vector<16x128xf32>
    %c0_23 = arith.constant 0 : index
    %c0_24 = arith.constant 0 : index
    %34 = vector.load %arg10[%c0_23, %c0_24] : memref<16x128xf32, #tpu.memory_space<vmem>>, vector<16x128xf32>
    tpu.vector_store %arg10[%c0_23, %c0_24], %33 {strides = array<i32>} : memref<16x128xf32, #tpu.memory_space<vmem>>, vector<16x128xf32>,
    %c2_i32 = arith.constant 2 : i32
    %c16_i32_25 = arith.constant 16 : i32
    %35 = arith.muli %c2_i32, %c16_i32_25 : i32
    %36 = tpu.assume_multiple %35, 16 : i32
    %37 = arith.index_cast %36 : i32 to index
    %c0_26 = arith.constant 0 : index
    %38 = vector.load %arg9[%37, %c0_26] : memref<128x128xbf16, #tpu.memory_space<vmem>>, vector<16x128xbf16>
    %39 = arith.extf %38 : vector<16x128xbf16> to vector<16x128xf32>
    %c0_27 = arith.constant 0 : index
    %c0_28 = arith.constant 0 : index
    %40 = vector.load %arg10[%c0_27, %c0_28] : memref<16x128xf32, #tpu.memory_space<vmem>>, vector<16x128xf32>
    %41 = arith.truncf %40 : vector<16x128xf32> to vector<16x128xbf16>
    %cst_29 = arith.constant dense<0.000000e+00> : vector<16x128xf32>
    %42 = tpu.matmul %41, %12, %cst_29 {dimension_numbers = #tpu.dot_dimension_numbers<[1], [0], [0], [1], [0, 0, 1, 1], [], []>} : vector<16x128xbf16>, vector<128x128xbf16>, vector<16x128xf32> -> vector<16x128xf32>
    %43 = arith.addf %39, %42 : vector<16x128xf32>
    %44 = math.tanh %43 : vector<16x128xf32>
    %c0_30 = arith.constant 0 : index
    %c0_31 = arith.constant 0 : index
    %45 = vector.load %arg10[%c0_30, %c0_31] : memref<16x128xf32, #tpu.memory_space<vmem>>, vector<16x128xf32>
    tpu.vector_store %arg10[%c0_30, %c0_31], %44 {strides = array<i32>} : memref<16x128xf32, #tpu.memory_space<vmem>>, vector<16x128xf32>,
    %c3_i32 = arith.constant 3 : i32
    %c16_i32_32 = arith.constant 16 : i32
    %46 = arith.muli %c3_i32, %c16_i32_32 : i32
    %47 = tpu.assume_multiple %46, 16 : i32
    %48 = arith.index_cast %47 : i32 to index
    %c0_33 = arith.constant 0 : index
    %49 = vector.load %arg9[%48, %c0_33] : memref<128x128xbf16, #tpu.memory_space<vmem>>, vector<16x128xbf16>
    %50 = arith.extf %49 : vector<16x128xbf16> to vector<16x128xf32>
    %c0_34 = arith.constant 0 : index
    %c0_35 = arith.constant 0 : index
    %51 = vector.load %arg10[%c0_34, %c0_35] : memref<16x128xf32, #tpu.memory_space<vmem>>, vector<16x128xf32>
    %52 = arith.truncf %51 : vector<16x128xf32> to vector<16x128xbf16>
    %cst_36 = arith.constant dense<0.000000e+00> : vector<16x128xf32>
    %53 = tpu.matmul %52, %12, %cst_36 {dimension_numbers = #tpu.dot_dimension_numbers<[1], [0], [0], [1], [0, 0, 1, 1], [], []>} : vector<16x128xbf16>, vector<128x128xbf16>, vector<16x128xf32> -> vector<16x128xf32>
    %54 = arith.addf %50, %53 : vector<16x128xf32>
    %55 = math.tanh %54 : vector<16x128xf32>
    %c0_37 = arith.constant 0 : index
    %c0_38 = arith.constant 0 : index
    %56 = vector.load %arg10[%c0_37, %c0_38] : memref<16x128xf32, #tpu.memory_space<vmem>>, vector<16x128xf32>
    tpu.vector_store %arg10[%c0_37, %c0_38], %55 {strides = array<i32>} : memref<16x128xf32, #tpu.memory_space<vmem>>, vector<16x128xf32>,
    %c4_i32 = arith.constant 4 : i32
    %c16_i32_39 = arith.constant 16 : i32
    %57 = arith.muli %c4_i32, %c16_i32_39 : i32
    %58 = tpu.assume_multiple %57, 16 : i32
    %59 = arith.index_cast %58 : i32 to index
    %c0_40 = arith.constant 0 : index
    %60 = vector.load %arg9[%59, %c0_40] : memref<128x128xbf16, #tpu.memory_space<vmem>>, vector<16x128xbf16>
    %61 = arith.extf %60 : vector<16x128xbf16> to vector<16x128xf32>
    %c0_41 = arith.constant 0 : index
    %c0_42 = arith.constant 0 : index
    %62 = vector.load %arg10[%c0_41, %c0_42] : memref<16x128xf32, #tpu.memory_space<vmem>>, vector<16x128xf32>
    %63 = arith.truncf %62 : vector<16x128xf32> to vector<16x128xbf16>
    %cst_43 = arith.constant dense<0.000000e+00> : vector<16x128xf32>
    %64 = tpu.matmul %63, %12, %cst_43 {dimension_numbers = #tpu.dot_dimension_numbers<[1], [0], [0], [1], [0, 0, 1, 1], [], []>} : vector<16x128xbf16>, vector<128x128xbf16>, vector<16x128xf32> -> vector<16x128xf32>
    %65 = arith.addf %61, %64 : vector<16x128xf32>
    %66 = math.tanh %65 : vector<16x128xf32>
    %c0_44 = arith.constant 0 : index
    %c0_45 = arith.constant 0 : index
    %67 = vector.load %arg10[%c0_44, %c0_45] : memref<16x128xf32, #tpu.memory_space<vmem>>, vector<16x128xf32>
    tpu.vector_store %arg10[%c0_44, %c0_45], %66 {strides = array<i32>} : memref<16x128xf32, #tpu.memory_space<vmem>>, vector<16x128xf32>,
    %c5_i32 = arith.constant 5 : i32
    %c16_i32_46 = arith.constant 16 : i32
    %68 = arith.muli %c5_i32, %c16_i32_46 : i32
    %69 = tpu.assume_multiple %68, 16 : i32
    %70 = arith.index_cast %69 : i32 to index
    %c0_47 = arith.constant 0 : index
    %71 = vector.load %arg9[%70, %c0_47] : memref<128x128xbf16, #tpu.memory_space<vmem>>, vector<16x128xbf16>
    %72 = arith.extf %71 : vector<16x128xbf16> to vector<16x128xf32>
    %c0_48 = arith.constant 0 : index
    %c0_49 = arith.constant 0 : index
    %73 = vector.load %arg10[%c0_48, %c0_49] : memref<16x128xf32, #tpu.memory_space<vmem>>, vector<16x128xf32>
    %74 = arith.truncf %73 : vector<16x128xf32> to vector<16x128xbf16>
    %cst_50 = arith.constant dense<0.000000e+00> : vector<16x128xf32>
    %75 = tpu.matmul %74, %12, %cst_50 {dimension_numbers = #tpu.dot_dimension_numbers<[1], [0], [0], [1], [0, 0, 1, 1], [], []>} : vector<16x128xbf16>, vector<128x128xbf16>, vector<16x128xf32> -> vector<16x128xf32>
    %76 = arith.addf %72, %75 : vector<16x128xf32>
    %77 = math.tanh %76 : vector<16x128xf32>
    %c0_51 = arith.constant 0 : index
    %c0_52 = arith.constant 0 : index
    %78 = vector.load %arg10[%c0_51, %c0_52] : memref<16x128xf32, #tpu.memory_space<vmem>>, vector<16x128xf32>
    tpu.vector_store %arg10[%c0_51, %c0_52], %77 {strides = array<i32>} : memref<16x128xf32, #tpu.memory_space<vmem>>, vector<16x128xf32>,
    %c6_i32 = arith.constant 6 : i32
    %c16_i32_53 = arith.constant 16 : i32
    %79 = arith.muli %c6_i32, %c16_i32_53 : i32
    %80 = tpu.assume_multiple %79, 16 : i32
    %81 = arith.index_cast %80 : i32 to index
    %c0_54 = arith.constant 0 : index
    %82 = vector.load %arg9[%81, %c0_54] : memref<128x128xbf16, #tpu.memory_space<vmem>>, vector<16x128xbf16>
    %83 = arith.extf %82 : vector<16x128xbf16> to vector<16x128xf32>
    %c0_55 = arith.constant 0 : index
    %c0_56 = arith.constant 0 : index
    %84 = vector.load %arg10[%c0_55, %c0_56] : memref<16x128xf32, #tpu.memory_space<vmem>>, vector<16x128xf32>
    %85 = arith.truncf %84 : vector<16x128xf32> to vector<16x128xbf16>
    %cst_57 = arith.constant dense<0.000000e+00> : vector<16x128xf32>
    %86 = tpu.matmul %85, %12, %cst_57 {dimension_numbers = #tpu.dot_dimension_numbers<[1], [0], [0], [1], [0, 0, 1, 1], [], []>} : vector<16x128xbf16>, vector<128x128xbf16>, vector<16x128xf32> -> vector<16x128xf32>
    %87 = arith.addf %83, %86 : vector<16x128xf32>
    %88 = math.tanh %87 : vector<16x128xf32>
    %c0_58 = arith.constant 0 : index
    %c0_59 = arith.constant 0 : index
    %89 = vector.load %arg10[%c0_58, %c0_59] : memref<16x128xf32, #tpu.memory_space<vmem>>, vector<16x128xf32>
    tpu.vector_store %arg10[%c0_58, %c0_59], %88 {strides = array<i32>} : memref<16x128xf32, #tpu.memory_space<vmem>>, vector<16x128xf32>,
    %c7_i32 = arith.constant 7 : i32
    %c16_i32_60 = arith.constant 16 : i32
    %90 = arith.muli %c7_i32, %c16_i32_60 : i32
    %91 = tpu.assume_multiple %90, 16 : i32
    %92 = arith.index_cast %91 : i32 to index
    %c0_61 = arith.constant 0 : index
    %93 = vector.load %arg9[%92, %c0_61] : memref<128x128xbf16, #tpu.memory_space<vmem>>, vector<16x128xbf16>
    %94 = arith.extf %93 : vector<16x128xbf16> to vector<16x128xf32>
    %c0_62 = arith.constant 0 : index
    %c0_63 = arith.constant 0 : index
    %95 = vector.load %arg10[%c0_62, %c0_63] : memref<16x128xf32, #tpu.memory_space<vmem>>, vector<16x128xf32>
    %96 = arith.truncf %95 : vector<16x128xf32> to vector<16x128xbf16>
    %cst_64 = arith.constant dense<0.000000e+00> : vector<16x128xf32>
    %97 = tpu.matmul %96, %12, %cst_64 {dimension_numbers = #tpu.dot_dimension_numbers<[1], [0], [0], [1], [0, 0, 1, 1], [], []>} : vector<16x128xbf16>, vector<128x128xbf16>, vector<16x128xf32> -> vector<16x128xf32>
    %98 = arith.addf %94, %97 : vector<16x128xf32>
    %99 = math.tanh %98 : vector<16x128xf32>
    %c0_65 = arith.constant 0 : index
    %c0_66 = arith.constant 0 : index
    %100 = vector.load %arg10[%c0_65, %c0_66] : memref<16x128xf32, #tpu.memory_space<vmem>>, vector<16x128xf32>
    tpu.vector_store %arg10[%c0_65, %c0_66], %99 {strides = array<i32>} : memref<16x128xf32, #tpu.memory_space<vmem>>, vector<16x128xf32>,
    %c8_i32 = arith.constant 8 : i32
    %c0_i32_67 = arith.constant 0 : i32
    %101 = arith.cmpi eq, %arg1, %c0_i32_67 : i32
    %102 = arith.extui %101 : i1 to i32
    %c0_i32_68 = arith.constant 0 : i32
    %103 = arith.cmpi ne, %102, %c0_i32_68 : i32
    scf.if %103 {
      %c0_69 = arith.constant 0 : index
      %c0_70 = arith.constant 0 : index
      %104 = vector.load %arg10[%c0_69, %c0_70] : memref<16x128xf32, #tpu.memory_space<vmem>>, vector<16x128xf32>
      %105 = arith.truncf %104 : vector<16x128xf32> to vector<16x128xbf16>
      %c0_71 = arith.constant 0 : index
      %c0_72 = arith.constant 0 : index
      %106 = vector.load %arg6[%c0_71, %c0_72] : memref<128x128xbf16, #tpu.memory_space<vmem>>, vector<128x128xbf16>
      %cst_73 = arith.constant dense<0.000000e+00> : vector<16x128xf32>
      %107 = tpu.matmul %105, %106, %cst_73 {dimension_numbers = #tpu.dot_dimension_numbers<[1], [0], [0], [1], [0, 0, 1, 1], [], []>} : vector<16x128xbf16>, vector<128x128xbf16>, vector<16x128xf32> -> vector<16x128xf32>
      %c0_74 = arith.constant 0 : index
      %c0_75 = arith.constant 0 : index
      %108 = vector.load %arg7[%c0_74, %c0_75] : memref<1x128xf32, #tpu.memory_space<vmem>>, vector<1x128xf32>
      %109 = vector.broadcast %108 : vector<1x128xf32> to vector<16x128xf32>
      %110 = arith.addf %107, %109 : vector<16x128xf32>
      %c0_76 = arith.constant 0 : index
      %c0_77 = arith.constant 0 : index
      %111 = vector.load %arg8[%c0_76, %c0_77] : memref<16x128xf32, #tpu.memory_space<vmem>>, vector<16x128xf32>
      tpu.vector_store %arg8[%c0_76, %c0_77], %110 {strides = array<i32>} : memref<16x128xf32, #tpu.memory_space<vmem>>, vector<16x128xf32>,
    } else {
    }
    return
  }
  func.func @transform_0(%arg0: i32, %arg1: i32) -> (i32, i32, i32) {
    %c0_i32 = arith.constant 0 : i32
    %c0_i32_0 = arith.constant 0 : i32
    return %arg0, %arg1, %c0_i32 : i32, i32, i32
  }
  func.func @transform_1(%arg0: i32, %arg1: i32) -> (i32, i32) {
    %c0_i32 = arith.constant 0 : i32
    %c0_i32_0 = arith.constant 0 : i32
    %c0_i32_1 = arith.constant 0 : i32
    return %c0_i32, %c0_i32_0 : i32, i32
  }
  func.func @transform_2(%arg0: i32, %arg1: i32) -> (i32, i32) {
    %c0_i32 = arith.constant 0 : i32
    %c0_i32_0 = arith.constant 0 : i32
    %c0_i32_1 = arith.constant 0 : i32
    return %c0_i32, %c0_i32_0 : i32, i32
  }
  func.func @transform_3(%arg0: i32, %arg1: i32) -> (i32, i32) {
    %c0_i32 = arith.constant 0 : i32
    %c0_i32_0 = arith.constant 0 : i32
    %c0_i32_1 = arith.constant 0 : i32
    return %c0_i32, %c0_i32_0 : i32, i32
  }
  func.func @transform_4(%arg0: i32, %arg1: i32) -> (i32, i32) {
    %c0_i32 = arith.constant 0 : i32
    %c0_i32_0 = arith.constant 0 : i32
    %c0_i32_1 = arith.constant 0 : i32
    return %c0_i32, %c0_i32_0 : i32, i32
  }
  func.func @transform_5(%arg0: i32, %arg1: i32) -> (i32, i32) {
    %c0_i32 = arith.constant 0 : i32
    %c0_i32_0 = arith.constant 0 : i32
    %c0_i32_1 = arith.constant 0 : i32
    return %c0_i32, %c0_i32_0 : i32, i32
  }
  func.func @transform_6(%arg0: i32, %arg1: i32) -> (i32, i32) {
    %c0_i32 = arith.constant 0 : i32
    %c0_i32_0 = arith.constant 0 : i32
    return %arg0, %c0_i32 : i32, i32
  }
}

</mosaic_0001>

<llo_original>
// kernel: rnn_forward.1
$region0: #{rnn_forward.1}
  #allocation0 [shape = 'u32[]', space=smem, size = 0x4, offset = 0x4, fixed_abs, tag = 'smem constant byte address 0x4 - core index']
  #allocation1 [shape = 'u32[72,128]{1,0:T(1,128)}', space=vmem, size = 0x9000, scoped, tag = 'internal scratch']
  #allocation2 [shape = 'bf16[128,128]{1,0:T(8,128)(2,1)}', space=vmem, size = 0x8000, scoped, tag = 'scratch operand']
  #allocation3 [shape = 'f32[16,128]{1,0:T(8,128)}', space=vmem, size = 0x2000, scoped, tag = 'scratch operand']
  %s0 = inlined_call_operand.vmem [shape: bf16[1,128,128], index: 0, kind: input, shape index: {}]
  %s1 = inlined_call_operand.vmem [shape: bf16[128,128], index: 1, kind: input, shape index: {}]
  %s2 = inlined_call_operand.vmem [shape: bf16[128,128], index: 2, kind: input, shape index: {}]
  %s3 = inlined_call_operand.vmem [shape: f32[1,128], index: 3, kind: input, shape index: {}]
  %s4 = inlined_call_operand.vmem [shape: bf16[128,128], index: 4, kind: input, shape index: {}]
  %s5 = inlined_call_operand.vmem [shape: f32[1,128], index: 5, kind: input, shape index: {}]
  %s6 = inlined_call_operand.vmem [shape: f32[16,128], index: 6, kind: output, shape index: {}]
  %s7 = sld [smem:[#allocation0]]
  $region42: #{rnn_forward.1} parent=0
    _
  %s9 = ssub.s32 1, %s7
  %s10 = scalar_select 0, %s9, %s7
  // Predicated region
  $region2: #{rnn_forward.1} parent=0 // pred_check
    _
  $region3: #{rnn_forward.1} parent=0 // pred_check_branch
    %12 = sbr.rel (0) target = $region5
  $region4: #{rnn_forward.1} parent=0 // pred_region
    _
  $region5: #{rnn_forward.1} parent=0 // pred_fallthru
    _
  // Predicated region
  $region6: #{rnn_forward.1} parent=0 // pred_check
    _
  $region7: #{rnn_forward.1} parent=0 // pred_check_branch
    %14 = sbr.rel (0) target = $region9
  $region8: #{rnn_forward.1} parent=0 // pred_region
    _
  $region9: #{rnn_forward.1} parent=0 // pred_fallthru
    _
  // Predicated region
  $region10: #{rnn_forward.1} parent=0 // pred_check
    _
  $region11: #{rnn_forward.1} parent=0 // pred_check_branch
    %16 = sbr.rel (0) target = $region13
  $region12: #{rnn_forward.1} parent=0 // pred_region
    _
  $region13: #{rnn_forward.1} parent=0 // pred_fallthru
    _
  // Predicated region
  $region14: #{rnn_forward.1} parent=0 // pred_check
    _
  $region15: #{rnn_forward.1} parent=0 // pred_check_branch
    %18 = sbr.rel (0) target = $region17
  $region16: #{rnn_forward.1} parent=0 // pred_region
    _
  $region17: #{rnn_forward.1} parent=0 // pred_fallthru
    _
  // Predicated region
  $region18: #{rnn_forward.1} parent=0 // pred_check
    _
  $region19: #{rnn_forward.1} parent=0 // pred_check_branch
    %20 = sbr.rel (0) target = $region21
  $region20: #{rnn_forward.1} parent=0 // pred_region
    _
  $region21: #{rnn_forward.1} parent=0 // pred_fallthru
    _
  // Predicated region
  $region22: #{rnn_forward.1} parent=0 // pred_check
    _
  $region23: #{rnn_forward.1} parent=0 // pred_check_branch
    %22 = sbr.rel (0) target = $region25
  $region24: #{rnn_forward.1} parent=0 // pred_region
    _
  $region25: #{rnn_forward.1} parent=0 // pred_fallthru
    _
  %p23 = scmp.eq.s32.totalorder 0, 0
  // Predicated region
  $region26: #{rnn_forward.1} parent=0 // pred_check
    %p24 = pneg %p23
  $region27: #{rnn_forward.1} parent=0 // pred_check_branch
    %26 = sbr.rel (%p24) target = $region29
  $region28: #{rnn_forward.1} parent=0 // pred_region
    %27 = vst [vmem:[#allocation3] sm:$0xff] 0.0
    %28 = vst [vmem:[#allocation3 + $0x8] sm:$0xff] 0.0
  $region29: #{rnn_forward.1} parent=0 // pred_fallthru
    _
  %v29 = vld [vmem:[%s0] sm:$0xf]
  %v30 = vld [vmem:[%s0 + $0x4] sm:$0xf]
  %v31 = vld [vmem:[%s0 + $0x8] sm:$0xf]
  %v32 = vld [vmem:[%s0 + $0xc] sm:$0xf]
  %v33 = vld [vmem:[%s0 + $0x10] sm:$0xf]
  %v34 = vld [vmem:[%s0 + $0x14] sm:$0xf]
  %v35 = vld [vmem:[%s0 + $0x18] sm:$0xf]
  %v36 = vld [vmem:[%s0 + $0x1c] sm:$0xf]
  %v37 = vld [vmem:[%s0 + $0x20] sm:$0xf]
  %v38 = vld [vmem:[%s0 + $0x24] sm:$0xf]
  %v39 = vld [vmem:[%s0 + $0x28] sm:$0xf]
  %v40 = vld [vmem:[%s0 + $0x2c] sm:$0xf]
  %v41 = vld [vmem:[%s0 + $0x30] sm:$0xf]
  %v42 = vld [vmem:[%s0 + $0x34] sm:$0xf]
  %v43 = vld [vmem:[%s0 + $0x38] sm:$0xf]
  %v44 = vld [vmem:[%s0 + $0x3c] sm:$0xf]
  %v45 = vld [vmem:[%s1] sm:$0xf]
  %v46 = vld [vmem:[%s1 + $0x4] sm:$0xf]
  %v47 = vld [vmem:[%s1 + $0x8] sm:$0xf]
  %v48 = vld [vmem:[%s1 + $0xc] sm:$0xf]
  %v49 = vld [vmem:[%s1 + $0x10] sm:$0xf]
  %v50 = vld [vmem:[%s1 + $0x14] sm:$0xf]
  %v51 = vld [vmem:[%s1 + $0x18] sm:$0xf]
  %v52 = vld [vmem:[%s1 + $0x1c] sm:$0xf]
  %v53 = vld [vmem:[%s1 + $0x20] sm:$0xf]
  %v54 = vld [vmem:[%s1 + $0x24] sm:$0xf]
  %v55 = vld [vmem:[%s1 + $0x28] sm:$0xf]
  %v56 = vld [vmem:[%s1 + $0x2c] sm:$0xf]
  %v57 = vld [vmem:[%s1 + $0x30] sm:$0xf]
  %v58 = vld [vmem:[%s1 + $0x34] sm:$0xf]
  %v59 = vld [vmem:[%s1 + $0x38] sm:$0xf]
  %v60 = vld [vmem:[%s1 + $0x3c] sm:$0xf]
  %v61 = vld [vmem:[%s3] sm:$0x1]
  %v63 = vperm.slane %v61, 0
  %v81 = vunpack.c.l.b16 %v29
  %v82 = vunpack.c.l.b16 %v30
  %v83 = vunpack.c.l.b16 %v31
  %v84 = vunpack.c.l.b16 %v32
  %v85 = vunpack.c.l.b16 %v33
  %v86 = vunpack.c.l.b16 %v34
  %v87 = vunpack.c.l.b16 %v35
  %v88 = vunpack.c.l.b16 %v36
  %v89 = vunpack.c.l.b16 %v37
  %v90 = vunpack.c.l.b16 %v38
  %v91 = vunpack.c.l.b16 %v39
  %v92 = vunpack.c.l.b16 %v40
  %v93 = vunpack.c.l.b16 %v41
  %v94 = vunpack.c.l.b16 %v42
  %v95 = vunpack.c.l.b16 %v43
  %v96 = vunpack.c.l.b16 %v44
  %v97 = vpack.c.b16 %v82, %v81
  %v98 = vpack.c.b16 %v84, %v83
  %v99 = vpack.c.b16 %v86, %v85
  %v100 = vpack.c.b16 %v88, %v87
  %v101 = vpack.c.b16 %v90, %v89
  %v102 = vpack.c.b16 %v92, %v91
  %v103 = vpack.c.b16 %v94, %v93
  %v104 = vpack.c.b16 %v96, %v95
  %v129 = vunpack.c.l.b16 %v45
  %v130 = vunpack.c.l.b16 %v46
  %v131 = vunpack.c.l.b16 %v47
  %v132 = vunpack.c.l.b16 %v48
  %v133 = vunpack.c.l.b16 %v49
  %v134 = vunpack.c.l.b16 %v50
  %v135 = vunpack.c.l.b16 %v51
  %v136 = vunpack.c.l.b16 %v52
  %v137 = vunpack.c.l.b16 %v53
  %v138 = vunpack.c.l.b16 %v54
  %v139 = vunpack.c.l.b16 %v55
  %v140 = vunpack.c.l.b16 %v56
  %v141 = vunpack.c.l.b16 %v57
  %v142 = vunpack.c.l.b16 %v58
  %v143 = vunpack.c.l.b16 %v59
  %v144 = vunpack.c.l.b16 %v60
  %v145 = vpack.c.b16 %v130, %v129
  %v146 = vpack.c.b16 %v132, %v131
  %v147 = vpack.c.b16 %v134, %v133
  %v148 = vpack.c.b16 %v136, %v135
  %v149 = vpack.c.b16 %v138, %v137
  %v150 = vpack.c.b16 %v140, %v139
  %v151 = vpack.c.b16 %v142, %v141
  %v152 = vpack.c.b16 %v144, %v143
  %161 = vmatpush.bf16.msra.mxu0 %v152
  %162 = vmatpush.bf16.msra.mxu0 %v151
  %163 = vmatpush.bf16.msra.mxu0 %v150
  %164 = vmatpush.bf16.msra.mxu0 %v149
  %165 = vmatpush.bf16.msra.mxu0 %v148
  %166 = vmatpush.bf16.msra.mxu0 %v147
  %167 = vmatpush.bf16.msra.mxu0 %v146
  %168 = vmatpush.bf16.msra.mxu0 %v145
  %169 = vmatmul.bf16.gmra.mxu0 %v97
  %v170 = vpop.f32.mrf.mxu0
  %v171 = vadd.f32 %v63, %v170
  %v172 = vpop.f32.mrf.mxu0
  %v173 = vadd.f32 %v63, %v172
  %174 = vmatmul.bf16.gmra.mxu0 %v98
  %v175 = vpop.f32.mrf.mxu0
  %v176 = vadd.f32 %v63, %v175
  %v177 = vpop.f32.mrf.mxu0
  %v178 = vadd.f32 %v63, %v177
  %179 = vmatmul.bf16.gmra.mxu0 %v99
  %v180 = vpop.f32.mrf.mxu0
  %v181 = vadd.f32 %v63, %v180
  %v182 = vpop.f32.mrf.mxu0
  %v183 = vadd.f32 %v63, %v182
  %184 = vmatmul.bf16.gmra.mxu0 %v100
  %v185 = vpop.f32.mrf.mxu0
  %v186 = vadd.f32 %v63, %v185
  %v187 = vpop.f32.mrf.mxu0
  %v188 = vadd.f32 %v63, %v187
  %189 = vmatmul.bf16.gmra.mxu0 %v101
  %v190 = vpop.f32.mrf.mxu0
  %v191 = vadd.f32 %v63, %v190
  %v192 = vpop.f32.mrf.mxu0
  %v193 = vadd.f32 %v63, %v192
  %194 = vmatmul.bf16.gmra.mxu0 %v102
  %v195 = vpop.f32.mrf.mxu0
  %v196 = vadd.f32 %v63, %v195
  %v197 = vpop.f32.mrf.mxu0
  %v198 = vadd.f32 %v63, %v197
  %199 = vmatmul.bf16.gmra.mxu0 %v103
  %v200 = vpop.f32.mrf.mxu0
  %v201 = vadd.f32 %v63, %v200
  %v202 = vpop.f32.mrf.mxu0
  %v203 = vadd.f32 %v63, %v202
  %204 = vmatmul.bf16.gmra.mxu0 %v104
  %v205 = vpop.f32.mrf.mxu0
  %v206 = vadd.f32 %v63, %v205
  %v207 = vpop.f32.mrf.mxu0
  %v208 = vadd.f32 %v63, %v207
  %209 = vdwg.mxu0
  %v210 = vpack.c.bf16 %v171, %v171
  %v211 = vpack.c.bf16 %v173, %v173
  %v212 = vpack.c.bf16 %v176, %v176
  %v213 = vpack.c.bf16 %v178, %v178
  %v214 = vpack.c.bf16 %v181, %v181
  %v215 = vpack.c.bf16 %v183, %v183
  %v216 = vpack.c.bf16 %v186, %v186
  %v217 = vpack.c.bf16 %v188, %v188
  %v218 = vpack.c.bf16 %v191, %v191
  %v219 = vpack.c.bf16 %v193, %v193
  %v220 = vpack.c.bf16 %v196, %v196
  %v221 = vpack.c.bf16 %v198, %v198
  %v222 = vpack.c.bf16 %v201, %v201
  %v223 = vpack.c.bf16 %v203, %v203
  %v224 = vpack.c.bf16 %v206, %v206
  %v225 = vpack.c.bf16 %v208, %v208
  %226 = vst [vmem:[#allocation2] sm:$0xf] %v210
  %227 = vst [vmem:[#allocation2 + $0x4] sm:$0xf] %v211
  %228 = vst [vmem:[#allocation2 + $0x8] sm:$0xf] %v212
  %229 = vst [vmem:[#allocation2 + $0xc] sm:$0xf] %v213
  %230 = vst [vmem:[#allocation2 + $0x10] sm:$0xf] %v214
  %231 = vst [vmem:[#allocation2 + $0x14] sm:$0xf] %v215
  %232 = vst [vmem:[#allocation2 + $0x18] sm:$0xf] %v216
  %233 = vst [vmem:[#allocation2 + $0x1c] sm:$0xf] %v217
  %234 = vst [vmem:[#allocation2 + $0x20] sm:$0xf] %v218
  %235 = vst [vmem:[#allocation2 + $0x24] sm:$0xf] %v219
  %236 = vst [vmem:[#allocation2 + $0x28] sm:$0xf] %v220
  %237 = vst [vmem:[#allocation2 + $0x2c] sm:$0xf] %v221
  %238 = vst [vmem:[#allocation2 + $0x30] sm:$0xf] %v222
  %239 = vst [vmem:[#allocation2 + $0x34] sm:$0xf] %v223
  %240 = vst [vmem:[#allocation2 + $0x38] sm:$0xf] %v224
  %241 = vst [vmem:[#allocation2 + $0x3c] sm:$0xf] %v225
  %v242 = vld [vmem:[%s2] sm:$0xf]
  %v243 = vld [vmem:[%s2 + $0x4] sm:$0xf]
  %v244 = vld [vmem:[%s2 + $0x8] sm:$0xf]
  %v245 = vld [vmem:[%s2 + $0xc] sm:$0xf]
  %v246 = vld [vmem:[%s2 + $0x10] sm:$0xf]
  %v247 = vld [vmem:[%s2 + $0x14] sm:$0xf]
  %v248 = vld [vmem:[%s2 + $0x18] sm:$0xf]
  %v249 = vld [vmem:[%s2 + $0x1c] sm:$0xf]
  %v250 = vld [vmem:[%s2 + $0x20] sm:$0xf]
  %v251 = vld [vmem:[%s2 + $0x24] sm:$0xf]
  %v252 = vld [vmem:[%s2 + $0x28] sm:$0xf]
  %v253 = vld [vmem:[%s2 + $0x2c] sm:$0xf]
  %v254 = vld [vmem:[%s2 + $0x30] sm:$0xf]
  %v255 = vld [vmem:[%s2 + $0x34] sm:$0xf]
  %v256 = vld [vmem:[%s2 + $0x38] sm:$0xf]
  %v257 = vld [vmem:[%s2 + $0x3c] sm:$0xf]
  %v258 = vld [vmem:[#allocation2] sm:$0xf]
  %v259 = vld [vmem:[#allocation2 + $0x4] sm:$0xf]
  %v260 = vunpack.c.l.bf16 %v258
  %v261 = vunpack.c.l.bf16 %v259
  %v262 = vld [vmem:[#allocation3] sm:$0xff]
  %v263 = vld [vmem:[#allocation3 + $0x8] sm:$0xff]
  %v264 = vpack.c.bf16 %v263, %v262
  %v281 = vunpack.c.l.b16 %v242
  %v282 = vunpack.c.l.b16 %v243
  %v283 = vunpack.c.l.b16 %v244
  %v284 = vunpack.c.l.b16 %v245
  %v285 = vunpack.c.l.b16 %v246
  %v286 = vunpack.c.l.b16 %v247
  %v287 = vunpack.c.l.b16 %v248
  %v288 = vunpack.c.l.b16 %v249
  %v289 = vunpack.c.l.b16 %v250
  %v290 = vunpack.c.l.b16 %v251
  %v291 = vunpack.c.l.b16 %v252
  %v292 = vunpack.c.l.b16 %v253
  %v293 = vunpack.c.l.b16 %v254
  %v294 = vunpack.c.l.b16 %v255
  %v295 = vunpack.c.l.b16 %v256
  %v296 = vunpack.c.l.b16 %v257
  %v297 = vpack.c.b16 %v282, %v281
  %v298 = vpack.c.b16 %v284, %v283
  %v299 = vpack.c.b16 %v286, %v285
  %v300 = vpack.c.b16 %v288, %v287
  %v301 = vpack.c.b16 %v290, %v289
  %v302 = vpack.c.b16 %v292, %v291
  %v303 = vpack.c.b16 %v294, %v293
  %v304 = vpack.c.b16 %v296, %v295
  %313 = vmatpush.bf16.msra.mxu0 %v304
  %314 = vmatpush.bf16.msra.mxu0 %v303
  %315 = vmatpush.bf16.msra.mxu0 %v302
  %316 = vmatpush.bf16.msra.mxu0 %v301
  %317 = vmatpush.bf16.msra.mxu0 %v300
  %318 = vmatpush.bf16.msra.mxu0 %v299
  %319 = vmatpush.bf16.msra.mxu0 %v298
  %320 = vmatpush.bf16.msra.mxu0 %v297
  %321 = vmatmul.bf16.gmra.mxu0 %v264
  %v322 = vpop.f32.mrf.mxu0
  %v323 = vadd.f32 0.0, %v322
  %v324 = vpop.f32.mrf.mxu0
  %v325 = vadd.f32 0.0, %v324
  %326 = vdwg.mxu0
  %v327 = vadd.f32 %v260, %v323
  %v328 = vadd.f32 %v261, %v325
  %v329 = vtanh.pop %v327
  %v330 = vtanh.pop %v328
  %331 = vst [vmem:[#allocation3] sm:$0xff] %v329
  %332 = vst [vmem:[#allocation3 + $0x8] sm:$0xff] %v330
  %s333 = scalar_lea.vmem [#allocation2], 8
  %v334 = vld [vmem:[%s333] sm:$0xf]
  %v335 = vld [vmem:[%s333 + $0x4] sm:$0xf]
  %v336 = vunpack.c.l.bf16 %v334
  %v337 = vunpack.c.l.bf16 %v335
  %v338 = vld [vmem:[#allocation3] sm:$0xff]
  %v339 = vld [vmem:[#allocation3 + $0x8] sm:$0xff]
  %v340 = vpack.c.bf16 %v339, %v338
  %341 = vmatpush.bf16.msra.mxu0 %v304
  %342 = vmatpush.bf16.msra.mxu0 %v303
  %343 = vmatpush.bf16.msra.mxu0 %v302
  %344 = vmatpush.bf16.msra.mxu0 %v301
  %345 = vmatpush.bf16.msra.mxu0 %v300
  %346 = vmatpush.bf16.msra.mxu0 %v299
  %347 = vmatpush.bf16.msra.mxu0 %v298
  %348 = vmatpush.bf16.msra.mxu0 %v297
  %349 = vmatmul.bf16.gmra.mxu0 %v340
  %v350 = vpop.f32.mrf.mxu0
  %v351 = vadd.f32 0.0, %v350
  %v352 = vpop.f32.mrf.mxu0
  %v353 = vadd.f32 0.0, %v352
  %354 = vdwg.mxu0
  %v355 = vadd.f32 %v336, %v351
  %v356 = vadd.f32 %v337, %v353
  %v357 = vtanh.pop %v355
  %v358 = vtanh.pop %v356
  %359 = vst [vmem:[#allocation3] sm:$0xff] %v357
  %360 = vst [vmem:[#allocation3 + $0x8] sm:$0xff] %v358
  %s361 = scalar_lea.vmem [#allocation2], 16
  %v362 = vld [vmem:[%s361] sm:$0xf]
  %v363 = vld [vmem:[%s361 + $0x4] sm:$0xf]
  %v364 = vunpack.c.l.bf16 %v362
  %v365 = vunpack.c.l.bf16 %v363
  %v366 = vld [vmem:[#allocation3] sm:$0xff]
  %v367 = vld [vmem:[#allocation3 + $0x8] sm:$0xff]
  %v368 = vpack.c.bf16 %v367, %v366
  %369 = vmatpush.bf16.msra.mxu0 %v304
  %370 = vmatpush.bf16.msra.mxu0 %v303
  %371 = vmatpush.bf16.msra.mxu0 %v302
  %372 = vmatpush.bf16.msra.mxu0 %v301
  %373 = vmatpush.bf16.msra.mxu0 %v300
  %374 = vmatpush.bf16.msra.mxu0 %v299
  %375 = vmatpush.bf16.msra.mxu0 %v298
  %376 = vmatpush.bf16.msra.mxu0 %v297
  %377 = vmatmul.bf16.gmra.mxu0 %v368
  %v378 = vpop.f32.mrf.mxu0
  %v379 = vadd.f32 0.0, %v378
  %v380 = vpop.f32.mrf.mxu0
  %v381 = vadd.f32 0.0, %v380
  %382 = vdwg.mxu0
  %v383 = vadd.f32 %v364, %v379
  %v384 = vadd.f32 %v365, %v381
  %v385 = vtanh.pop %v383
  %v386 = vtanh.pop %v384
  %387 = vst [vmem:[#allocation3] sm:$0xff] %v385
  %388 = vst [vmem:[#allocation3 + $0x8] sm:$0xff] %v386
  %s389 = scalar_lea.vmem [#allocation2], 24
  %v390 = vld [vmem:[%s389] sm:$0xf]
  %v391 = vld [vmem:[%s389 + $0x4] sm:$0xf]
  %v392 = vunpack.c.l.bf16 %v390
  %v393 = vunpack.c.l.bf16 %v391
  %v394 = vld [vmem:[#allocation3] sm:$0xff]
  %v395 = vld [vmem:[#allocation3 + $0x8] sm:$0xff]
  %v396 = vpack.c.bf16 %v395, %v394
  %397 = vmatpush.bf16.msra.mxu0 %v304
  %398 = vmatpush.bf16.msra.mxu0 %v303
  %399 = vmatpush.bf16.msra.mxu0 %v302
  %400 = vmatpush.bf16.msra.mxu0 %v301
  %401 = vmatpush.bf16.msra.mxu0 %v300
  %402 = vmatpush.bf16.msra.mxu0 %v299
  %403 = vmatpush.bf16.msra.mxu0 %v298
  %404 = vmatpush.bf16.msra.mxu0 %v297
  %405 = vmatmul.bf16.gmra.mxu0 %v396
  %v406 = vpop.f32.mrf.mxu0
  %v407 = vadd.f32 0.0, %v406
  %v408 = vpop.f32.mrf.mxu0
  %v409 = vadd.f32 0.0, %v408
  %410 = vdwg.mxu0
  %v411 = vadd.f32 %v392, %v407
  %v412 = vadd.f32 %v393, %v409
  %v413 = vtanh.pop %v411
  %v414 = vtanh.pop %v412
  %415 = vst [vmem:[#allocation3] sm:$0xff] %v413
  %416 = vst [vmem:[#allocation3 + $0x8] sm:$0xff] %v414
  %s417 = scalar_lea.vmem [#allocation2], 32
  %v418 = vld [vmem:[%s417] sm:$0xf]
  %v419 = vld [vmem:[%s417 + $0x4] sm:$0xf]
  %v420 = vunpack.c.l.bf16 %v418
  %v421 = vunpack.c.l.bf16 %v419
  %v422 = vld [vmem:[#allocation3] sm:$0xff]
  %v423 = vld [vmem:[#allocation3 + $0x8] sm:$0xff]
  %v424 = vpack.c.bf16 %v423, %v422
  %425 = vmatpush.bf16.msra.mxu0 %v304
  %426 = vmatpush.bf16.msra.mxu0 %v303
  %427 = vmatpush.bf16.msra.mxu0 %v302
  %428 = vmatpush.bf16.msra.mxu0 %v301
  %429 = vmatpush.bf16.msra.mxu0 %v300
  %430 = vmatpush.bf16.msra.mxu0 %v299
  %431 = vmatpush.bf16.msra.mxu0 %v298
  %432 = vmatpush.bf16.msra.mxu0 %v297
  %433 = vmatmul.bf16.gmra.mxu0 %v424
  %v434 = vpop.f32.mrf.mxu0
  %v435 = vadd.f32 0.0, %v434
  %v436 = vpop.f32.mrf.mxu0
  %v437 = vadd.f32 0.0, %v436
  %438 = vdwg.mxu0
  %v439 = vadd.f32 %v420, %v435
  %v440 = vadd.f32 %v421, %v437
  %v441 = vtanh.pop %v439
  %v442 = vtanh.pop %v440
  %443 = vst [vmem:[#allocation3] sm:$0xff] %v441
  %444 = vst [vmem:[#allocation3 + $0x8] sm:$0xff] %v442
  %s445 = scalar_lea.vmem [#allocation2], 40
  %v446 = vld [vmem:[%s445] sm:$0xf]
  %v447 = vld [vmem:[%s445 + $0x4] sm:$0xf]
  %v448 = vunpack.c.l.bf16 %v446
  %v449 = vunpack.c.l.bf16 %v447
  %v450 = vld [vmem:[#allocation3] sm:$0xff]
  %v451 = vld [vmem:[#allocation3 + $0x8] sm:$0xff]
  %v452 = vpack.c.bf16 %v451, %v450
  %453 = vmatpush.bf16.msra.mxu0 %v304
  %454 = vmatpush.bf16.msra.mxu0 %v303
  %455 = vmatpush.bf16.msra.mxu0 %v302
  %456 = vmatpush.bf16.msra.mxu0 %v301
  %457 = vmatpush.bf16.msra.mxu0 %v300
  %458 = vmatpush.bf16.msra.mxu0 %v299
  %459 = vmatpush.bf16.msra.mxu0 %v298
  %460 = vmatpush.bf16.msra.mxu0 %v297
  %461 = vmatmul.bf16.gmra.mxu0 %v452
  %v462 = vpop.f32.mrf.mxu0
  %v463 = vadd.f32 0.0, %v462
  %v464 = vpop.f32.mrf.mxu0
  %v465 = vadd.f32 0.0, %v464
  %466 = vdwg.mxu0
  %v467 = vadd.f32 %v448, %v463
  %v468 = vadd.f32 %v449, %v465
  %v469 = vtanh.pop %v467
  %v470 = vtanh.pop %v468
  %471 = vst [vmem:[#allocation3] sm:$0xff] %v469
  %472 = vst [vmem:[#allocation3 + $0x8] sm:$0xff] %v470
  %s473 = scalar_lea.vmem [#allocation2], 48
  %v474 = vld [vmem:[%s473] sm:$0xf]
  %v475 = vld [vmem:[%s473 + $0x4] sm:$0xf]
  %v476 = vunpack.c.l.bf16 %v474
  %v477 = vunpack.c.l.bf16 %v475
  %v478 = vld [vmem:[#allocation3] sm:$0xff]
  %v479 = vld [vmem:[#allocation3 + $0x8] sm:$0xff]
  %v480 = vpack.c.bf16 %v479, %v478
  %481 = vmatpush.bf16.msra.mxu0 %v304
  %482 = vmatpush.bf16.msra.mxu0 %v303
  %483 = vmatpush.bf16.msra.mxu0 %v302
  %484 = vmatpush.bf16.msra.mxu0 %v301
  %485 = vmatpush.bf16.msra.mxu0 %v300
  %486 = vmatpush.bf16.msra.mxu0 %v299
  %487 = vmatpush.bf16.msra.mxu0 %v298
  %488 = vmatpush.bf16.msra.mxu0 %v297
  %489 = vmatmul.bf16.gmra.mxu0 %v480
  %v490 = vpop.f32.mrf.mxu0
  %v491 = vadd.f32 0.0, %v490
  %v492 = vpop.f32.mrf.mxu0
  %v493 = vadd.f32 0.0, %v492
  %494 = vdwg.mxu0
  %v495 = vadd.f32 %v476, %v491
  %v496 = vadd.f32 %v477, %v493
  %v497 = vtanh.pop %v495
  %v498 = vtanh.pop %v496
  %499 = vst [vmem:[#allocation3] sm:$0xff] %v497
  %500 = vst [vmem:[#allocation3 + $0x8] sm:$0xff] %v498
  %s501 = scalar_lea.vmem [#allocation2], 56
  %v502 = vld [vmem:[%s501] sm:$0xf]
  %v503 = vld [vmem:[%s501 + $0x4] sm:$0xf]
  %v504 = vunpack.c.l.bf16 %v502
  %v505 = vunpack.c.l.bf16 %v503
  %v506 = vld [vmem:[#allocation3] sm:$0xff]
  %v507 = vld [vmem:[#allocation3 + $0x8] sm:$0xff]
  %v508 = vpack.c.bf16 %v507, %v506
  %509 = vmatpush.bf16.msra.mxu0 %v304
  %510 = vmatpush.bf16.msra.mxu0 %v303
  %511 = vmatpush.bf16.msra.mxu0 %v302
  %512 = vmatpush.bf16.msra.mxu0 %v301
  %513 = vmatpush.bf16.msra.mxu0 %v300
  %514 = vmatpush.bf16.msra.mxu0 %v299
  %515 = vmatpush.bf16.msra.mxu0 %v298
  %516 = vmatpush.bf16.msra.mxu0 %v297
  %517 = vmatmul.bf16.gmra.mxu0 %v508
  %v518 = vpop.f32.mrf.mxu0
  %v519 = vadd.f32 0.0, %v518
  %v520 = vpop.f32.mrf.mxu0
  %v521 = vadd.f32 0.0, %v520
  %522 = vdwg.mxu0
  %v523 = vadd.f32 %v504, %v519
  %v524 = vadd.f32 %v505, %v521
  %v525 = vtanh.pop %v523
  %v526 = vtanh.pop %v524
  %527 = vst [vmem:[#allocation3] sm:$0xff] %v525
  %528 = vst [vmem:[#allocation3 + $0x8] sm:$0xff] %v526
  // Predicated region
  $region30: #{rnn_forward.1} parent=0 // pred_check
    %p529 = pneg %p23
  $region31: #{rnn_forward.1} parent=0 // pred_check_branch
    %531 = sbr.rel (%p529) target = $region33
  $region32: #{rnn_forward.1} parent=0 // pred_region
    %v532 = vld [vmem:[#allocation3] sm:$0xff]
    %v533 = vld [vmem:[#allocation3 + $0x8] sm:$0xff]
    %v534 = vpack.c.bf16 %v533, %v532
    %v535 = vld [vmem:[%s4] sm:$0xf]
    %v536 = vld [vmem:[%s4 + $0x4] sm:$0xf]
    %v537 = vld [vmem:[%s4 + $0x8] sm:$0xf]
    %v538 = vld [vmem:[%s4 + $0xc] sm:$0xf]
    %v539 = vld [vmem:[%s4 + $0x10] sm:$0xf]
    %v540 = vld [vmem:[%s4 + $0x14] sm:$0xf]
    %v541 = vld [vmem:[%s4 + $0x18] sm:$0xf]
    %v542 = vld [vmem:[%s4 + $0x1c] sm:$0xf]
    %v543 = vld [vmem:[%s4 + $0x20] sm:$0xf]
    %v544 = vld [vmem:[%s4 + $0x24] sm:$0xf]
    %v545 = vld [vmem:[%s4 + $0x28] sm:$0xf]
    %v546 = vld [vmem:[%s4 + $0x2c] sm:$0xf]
    %v547 = vld [vmem:[%s4 + $0x30] sm:$0xf]
    %v548 = vld [vmem:[%s4 + $0x34] sm:$0xf]
    %v549 = vld [vmem:[%s4 + $0x38] sm:$0xf]
    %v550 = vld [vmem:[%s4 + $0x3c] sm:$0xf]
    %v551 = vld [vmem:[%s5] sm:$0x1]
    %v553 = vperm.slane %v551, 0
    %v571 = vunpack.c.l.b16 %v535
    %v572 = vunpack.c.l.b16 %v536
    %v573 = vunpack.c.l.b16 %v537
    %v574 = vunpack.c.l.b16 %v538
    %v575 = vunpack.c.l.b16 %v539
    %v576 = vunpack.c.l.b16 %v540
    %v577 = vunpack.c.l.b16 %v541
    %v578 = vunpack.c.l.b16 %v542
    %v579 = vunpack.c.l.b16 %v543
    %v580 = vunpack.c.l.b16 %v544
    %v581 = vunpack.c.l.b16 %v545
    %v582 = vunpack.c.l.b16 %v546
    %v583 = vunpack.c.l.b16 %v547
    %v584 = vunpack.c.l.b16 %v548
    %v585 = vunpack.c.l.b16 %v549
    %v586 = vunpack.c.l.b16 %v550
    %v587 = vpack.c.b16 %v572, %v571
    %v588 = vpack.c.b16 %v574, %v573
    %v589 = vpack.c.b16 %v576, %v575
    %v590 = vpack.c.b16 %v578, %v577
    %v591 = vpack.c.b16 %v580, %v579
    %v592 = vpack.c.b16 %v582, %v581
    %v593 = vpack.c.b16 %v584, %v583
    %v594 = vpack.c.b16 %v586, %v585
    %603 = vmatpush.bf16.msra.mxu0 %v594
    %604 = vmatpush.bf16.msra.mxu0 %v593
    %605 = vmatpush.bf16.msra.mxu0 %v592
    %606 = vmatpush.bf16.msra.mxu0 %v591
    %607 = vmatpush.bf16.msra.mxu0 %v590
    %608 = vmatpush.bf16.msra.mxu0 %v589
    %609 = vmatpush.bf16.msra.mxu0 %v588
    %610 = vmatpush.bf16.msra.mxu0 %v587
    %611 = vmatmul.bf16.gmra.mxu0 %v534
    %v612 = vpop.f32.mrf.mxu0
    %v613 = vadd.f32 %v553, %v612
    %v614 = vpop.f32.mrf.mxu0
    %v615 = vadd.f32 %v553, %v614
    %616 = vdwg.mxu0
    %617 = vst [vmem:[%s6] sm:$0xff] %v613
    %618 = vst [vmem:[%s6 + $0x8] sm:$0xff] %v615
  $region33: #{rnn_forward.1} parent=0 // pred_fallthru
    _
  // Predicated region
  $region34: #{rnn_forward.1} parent=0 // pred_check
    _
  $region35: #{rnn_forward.1} parent=0 // pred_check_branch
    %620 = sbr.rel (0) target = $region37
  $region36: #{rnn_forward.1} parent=0 // pred_region
    _
  $region37: #{rnn_forward.1} parent=0 // pred_fallthru
    _
  // Predicated region
  $region38: #{rnn_forward.1} parent=0 // pred_check
    _
  $region39: #{rnn_forward.1} parent=0 // pred_check_branch
    %622 = sbr.rel (0) target = $region41
  $region40: #{rnn_forward.1} parent=0 // pred_region
    _
  $region41: #{rnn_forward.1} parent=0 // pred_fallthru
    _

</llo_original>
